<compile_context>
chip_gen: v7x
topology: tpu7x:2x2x1
jax: 0.10.0
libtpu: 0.0.40
codegen_flags: <defaults>
</compile_context>

<pallas_src>
import functools

import jax
import jax.numpy as jnp
from jax.experimental import pallas as pl
from jax.experimental.pallas import tpu as pltpu

Z_SIZE = 32
DIMS = [Z_SIZE, 128, 64, 32, 16, 1]   # layer widths (PyTorch module)


def _elu(v):
    # F.elu with default alpha=1.0. exp(v)-1 in f32 is well inside 1e-5 tol.
    return jnp.where(v > 0, v, jnp.exp(v) - 1.0)


def critic_kernel(x_ref,
                  w1_ref, b1_ref,
                  w2_ref, b2_ref,
                  w3_ref, b3_ref,
                  w4_ref, b4_ref,
                  w5_ref, b5_ref,
                  o_ref):
    h = _elu(jnp.dot(x_ref[...], w1_ref[...],
                     preferred_element_type=jnp.float32) + b1_ref[...])
    h = _elu(jnp.dot(h, w2_ref[...],
                     preferred_element_type=jnp.float32) + b2_ref[...])
    h = _elu(jnp.dot(h, w3_ref[...],
                     preferred_element_type=jnp.float32) + b3_ref[...])
    h = _elu(jnp.dot(h, w4_ref[...],
                     preferred_element_type=jnp.float32) + b4_ref[...])
    # Layer 5 (16 -> 1): VPU multiply + lane reduction instead of a padded
    # matmul. w5_ref is a (1, 16) row, b5_ref is (1, 1); result is (block, 1).
    o_ref[...] = jnp.sum(h * w5_ref[...], axis=-1, keepdims=True) + b5_ref[...]


def _round_up(x, m):
    return (x + m - 1) // m * m


def _cdiv(a, b):
    return -(-a // b)


def pack_params(params):
    """One-time packing (call outside the hot path).

    params = [(W, b)] with W:(din, dout), b:(1, dout). Returns a flat tuple
    with w5 reshaped to a (1, 16) row and b5 to (1, 1) for the mul+reduce
    final layer.
    """
    (w1, b1), (w2, b2), (w3, b3), (w4, b4), (w5, b5) = params
    return (w1, b1, w2, b2, w3, b3, w4, b4,
            jnp.reshape(w5, (1, DIMS[4])), jnp.reshape(b5, (1, 1)))


@functools.partial(jax.jit, static_argnames=("block_b",))
def critic_forward(x, packed, block_b=2048):
    """Critic forward pass. `packed` is the tuple returned by pack_params."""
    B, z = x.shape
    assert z == Z_SIZE

    block_cap = max(8, _round_up(block_b, 8))
    # >= 2 grid steps when B > 8 so ("parallel",) shards the batch across both
    # v7x TensorCores (harmless on 1-TC v5e/v6e); smallest step count whose
    # 8-aligned block fits the cap -> minimal batch-padding waste.
    min_steps = 2 if B > 8 else 1
    n_steps = max(min_steps, _cdiv(B, block_cap))
    block = _round_up(_cdiv(B, n_steps), 8)
    B_pad = n_steps * block
    if B_pad != B:
        x = jnp.pad(x, ((0, B_pad - B), (0, 0)))   # zero-padded tail rows

    # x tile + resident weights (constant index_maps -> fetched once).
    in_specs = [pl.BlockSpec((block, z), lambda i: (i, 0))]
    for a in packed:
        d0, d1 = a.shape
        in_specs.append(pl.BlockSpec((d0, d1), lambda i: (0, 0)))

    # Advisory cost estimate for XLA's scheduler around this short call.
    matmul_dims = list(zip(DIMS[:4], DIMS[1:5]))
    flops = 2 * B_pad * sum(di * do for di, do in matmul_dims) \
        + B_pad * (2 * DIMS[4] + 1)
    transcendentals = B_pad * sum(DIMS[1:5])
    weight_bytes = sum(a.size * 4 for a in packed)
    bytes_accessed = B_pad * z * 4 + weight_bytes + B_pad * 1 * 4

    grid_spec = pltpu.PrefetchScalarGridSpec(
        num_scalar_prefetch=0,
        grid=(n_steps,),
        in_specs=in_specs,
        out_specs=pl.BlockSpec((block, 1), lambda i: (i, 0)),
    )

    out = pl.pallas_call(
        critic_kernel,
        out_shape=jax.ShapeDtypeStruct((B_pad, 1), jnp.float32),
        grid_spec=grid_spec,
        compiler_params=pltpu.CompilerParams(
            dimension_semantics=("parallel",)),
        cost_estimate=pl.CostEstimate(
            flops=flops,
            transcendentals=transcendentals,
            bytes_accessed=bytes_accessed),
    )(x, *packed)

    return out[:B] if B_pad != B else out


def init_params(key):
    """Deterministic init matching nn.Linear shapes (stored as (in, out))."""
    params = []
    for (din, dout) in zip(DIMS[:-1], DIMS[1:]):
        key, kw, kb = jax.random.split(key, 3)
        bound = 1.0 / jnp.sqrt(din)  # PyTorch default Linear init range
        w = jax.random.uniform(kw, (din, dout), jnp.float32, -bound, bound)
        b = jax.random.uniform(kb, (1, dout), jnp.float32, -bound, bound)
        params.append((w, b))
    return params


def critic_reference(x, params):
    """Plain-JAX reference for correctness check."""
    h = x
    for i, (w, b) in enumerate(params):
        h = h @ w + b
        if i < len(params) - 1:
            h = _elu(h)
    return h


if __name__ == "__main__":
    key = jax.random.PRNGKey(0)
    kp, kx = jax.random.split(key)
    params = init_params(kp)
    packed = pack_params(params)          # one-time packing, outside hot path

    # Small batch, deliberately NOT a multiple of 8, to exercise the padded
    # tail and the >=2-step grid split.
    B = 20
    x = jax.random.normal(kx, (B, Z_SIZE), jnp.float32)

    out = critic_forward(x, packed)
    out = jax.block_until_ready(out)

    ref = critic_reference(x, params)
    assert out.shape == (B, 1)
    assert jnp.allclose(out, ref, atol=1e-5, rtol=1e-5), "mismatch vs reference"

    print("KERNEL_OK")
</pallas_src>

<mosaic_0001>
module attributes {stable_mosaic.version = 11 : i64} {
  func.func @critic_kernel(%arg0: i32, %arg1: memref<16x32xf32, #tpu.memory_space<vmem>>, %arg2: memref<32x128xf32, #tpu.memory_space<vmem>>, %arg3: memref<1x128xf32, #tpu.memory_space<vmem>>, %arg4: memref<128x64xf32, #tpu.memory_space<vmem>>, %arg5: memref<1x64xf32, #tpu.memory_space<vmem>>, %arg6: memref<64x32xf32, #tpu.memory_space<vmem>>, %arg7: memref<1x32xf32, #tpu.memory_space<vmem>>, %arg8: memref<32x16xf32, #tpu.memory_space<vmem>>, %arg9: memref<1x16xf32, #tpu.memory_space<vmem>>, %arg10: memref<1x16xf32, #tpu.memory_space<vmem>>, %arg11: memref<1x1xf32, #tpu.memory_space<vmem>>, %arg12: memref<16x1xf32, #tpu.memory_space<vmem>>) attributes {dimension_semantics = [#tpu.dimension_semantics<parallel>], iteration_bounds = array<i64: 2>, scalar_prefetch = 0 : i64, scratch_operands = 0 : i64, tpu.core_type = #tpu.core_type<tc>, window_params = [{transform_indices = @transform_0, window_bounds = array<i64: 16, 32>}, {pipeline_mode = #tpu.pipeline_mode<synchronous>, transform_indices = @transform_1, window_bounds = array<i64: 32, 128>}, {pipeline_mode = #tpu.pipeline_mode<synchronous>, transform_indices = @transform_2, window_bounds = array<i64: 1, 128>}, {pipeline_mode = #tpu.pipeline_mode<synchronous>, transform_indices = @transform_3, window_bounds = array<i64: 128, 64>}, {pipeline_mode = #tpu.pipeline_mode<synchronous>, transform_indices = @transform_4, window_bounds = array<i64: 1, 64>}, {pipeline_mode = #tpu.pipeline_mode<synchronous>, transform_indices = @transform_5, window_bounds = array<i64: 64, 32>}, {pipeline_mode = #tpu.pipeline_mode<synchronous>, transform_indices = @transform_6, window_bounds = array<i64: 1, 32>}, {pipeline_mode = #tpu.pipeline_mode<synchronous>, transform_indices = @transform_7, window_bounds = array<i64: 32, 16>}, {pipeline_mode = #tpu.pipeline_mode<synchronous>, transform_indices = @transform_8, window_bounds = array<i64: 1, 16>}, {pipeline_mode = #tpu.pipeline_mode<synchronous>, transform_indices = @transform_9, window_bounds = array<i64: 1, 16>}, {pipeline_mode = #tpu.pipeline_mode<synchronous>, transform_indices = @transform_10, window_bounds = array<i64: 1, 1>}, {transform_indices = @transform_11, window_bounds = array<i64: 16, 1>}]} {
    %c0 = arith.constant 0 : index
    %c0_0 = arith.constant 0 : index
    %0 = vector.load %arg1[%c0, %c0_0] : memref<16x32xf32, #tpu.memory_space<vmem>>, vector<16x32xf32>
    %c0_1 = arith.constant 0 : index
    %c0_2 = arith.constant 0 : index
    %1 = vector.load %arg2[%c0_1, %c0_2] : memref<32x128xf32, #tpu.memory_space<vmem>>, vector<32x128xf32>
    %cst = arith.constant dense<0.000000e+00> : vector<16x128xf32>
    %2 = tpu.matmul %0, %1, %cst {dimension_numbers = #tpu.dot_dimension_numbers<[1], [0], [0], [1], [0, 0, 1, 1], [], []>} : vector<16x32xf32>, vector<32x128xf32>, vector<16x128xf32> -> vector<16x128xf32>
    %c0_3 = arith.constant 0 : index
    %c0_4 = arith.constant 0 : index
    %3 = vector.load %arg3[%c0_3, %c0_4] : memref<1x128xf32, #tpu.memory_space<vmem>>, vector<1x128xf32>
    %4 = vector.broadcast %3 : vector<1x128xf32> to vector<16x128xf32>
    %5 = arith.addf %2, %4 : vector<16x128xf32>
    %cst_5 = arith.constant 0.000000e+00 : f32
    %6 = vector.broadcast %cst_5 : f32 to vector<16x128xf32>
    %7 = arith.cmpf ogt, %5, %6 : vector<16x128xf32>
    %8 = math.exp %5 : vector<16x128xf32>
    %cst_6 = arith.constant 1.000000e+00 : f32
    %9 = vector.broadcast %cst_6 : f32 to vector<16x128xf32>
    %10 = arith.subf %8, %9 : vector<16x128xf32>
    %11 = arith.select %7, %5, %10 : vector<16x128xi1>, vector<16x128xf32>
    %c0_7 = arith.constant 0 : index
    %c0_8 = arith.constant 0 : index
    %12 = vector.load %arg4[%c0_7, %c0_8] : memref<128x64xf32, #tpu.memory_space<vmem>>, vector<128x64xf32>
    %cst_9 = arith.constant dense<0.000000e+00> : vector<16x64xf32>
    %13 = tpu.matmul %11, %12, %cst_9 {dimension_numbers = #tpu.dot_dimension_numbers<[1], [0], [0], [1], [0, 0, 1, 1], [], []>} : vector<16x128xf32>, vector<128x64xf32>, vector<16x64xf32> -> vector<16x64xf32>
    %c0_10 = arith.constant 0 : index
    %c0_11 = arith.constant 0 : index
    %14 = vector.load %arg5[%c0_10, %c0_11] : memref<1x64xf32, #tpu.memory_space<vmem>>, vector<1x64xf32>
    %15 = vector.broadcast %14 : vector<1x64xf32> to vector<16x64xf32>
    %16 = arith.addf %13, %15 : vector<16x64xf32>
    %cst_12 = arith.constant 0.000000e+00 : f32
    %17 = vector.broadcast %cst_12 : f32 to vector<16x64xf32>
    %18 = arith.cmpf ogt, %16, %17 : vector<16x64xf32>
    %19 = math.exp %16 : vector<16x64xf32>
    %cst_13 = arith.constant 1.000000e+00 : f32
    %20 = vector.broadcast %cst_13 : f32 to vector<16x64xf32>
    %21 = arith.subf %19, %20 : vector<16x64xf32>
    %22 = arith.select %18, %16, %21 : vector<16x64xi1>, vector<16x64xf32>
    %c0_14 = arith.constant 0 : index
    %c0_15 = arith.constant 0 : index
    %23 = vector.load %arg6[%c0_14, %c0_15] : memref<64x32xf32, #tpu.memory_space<vmem>>, vector<64x32xf32>
    %cst_16 = arith.constant dense<0.000000e+00> : vector<16x32xf32>
    %24 = tpu.matmul %22, %23, %cst_16 {dimension_numbers = #tpu.dot_dimension_numbers<[1], [0], [0], [1], [0, 0, 1, 1], [], []>} : vector<16x64xf32>, vector<64x32xf32>, vector<16x32xf32> -> vector<16x32xf32>
    %c0_17 = arith.constant 0 : index
    %c0_18 = arith.constant 0 : index
    %25 = vector.load %arg7[%c0_17, %c0_18] : memref<1x32xf32, #tpu.memory_space<vmem>>, vector<1x32xf32>
    %26 = vector.broadcast %25 : vector<1x32xf32> to vector<16x32xf32>
    %27 = arith.addf %24, %26 : vector<16x32xf32>
    %cst_19 = arith.constant 0.000000e+00 : f32
    %28 = vector.broadcast %cst_19 : f32 to vector<16x32xf32>
    %29 = arith.cmpf ogt, %27, %28 : vector<16x32xf32>
    %30 = math.exp %27 : vector<16x32xf32>
    %cst_20 = arith.constant 1.000000e+00 : f32
    %31 = vector.broadcast %cst_20 : f32 to vector<16x32xf32>
    %32 = arith.subf %30, %31 : vector<16x32xf32>
    %33 = arith.select %29, %27, %32 : vector<16x32xi1>, vector<16x32xf32>
    %c0_21 = arith.constant 0 : index
    %c0_22 = arith.constant 0 : index
    %34 = vector.load %arg8[%c0_21, %c0_22] : memref<32x16xf32, #tpu.memory_space<vmem>>, vector<32x16xf32>
    %cst_23 = arith.constant dense<0.000000e+00> : vector<16x16xf32>
    %35 = tpu.matmul %33, %34, %cst_23 {dimension_numbers = #tpu.dot_dimension_numbers<[1], [0], [0], [1], [0, 0, 1, 1], [], []>} : vector<16x32xf32>, vector<32x16xf32>, vector<16x16xf32> -> vector<16x16xf32>
    %c0_24 = arith.constant 0 : index
    %c0_25 = arith.constant 0 : index
    %36 = vector.load %arg9[%c0_24, %c0_25] : memref<1x16xf32, #tpu.memory_space<vmem>>, vector<1x16xf32>
    %37 = vector.broadcast %36 : vector<1x16xf32> to vector<16x16xf32>
    %38 = arith.addf %35, %37 : vector<16x16xf32>
    %cst_26 = arith.constant 0.000000e+00 : f32
    %39 = vector.broadcast %cst_26 : f32 to vector<16x16xf32>
    %40 = arith.cmpf ogt, %38, %39 : vector<16x16xf32>
    %41 = math.exp %38 : vector<16x16xf32>
    %cst_27 = arith.constant 1.000000e+00 : f32
    %42 = vector.broadcast %cst_27 : f32 to vector<16x16xf32>
    %43 = arith.subf %41, %42 : vector<16x16xf32>
    %44 = arith.select %40, %38, %43 : vector<16x16xi1>, vector<16x16xf32>
    %c0_28 = arith.constant 0 : index
    %c0_29 = arith.constant 0 : index
    %45 = vector.load %arg10[%c0_28, %c0_29] : memref<1x16xf32, #tpu.memory_space<vmem>>, vector<1x16xf32>
    %46 = vector.broadcast %45 : vector<1x16xf32> to vector<16x16xf32>
    %47 = arith.mulf %44, %46 : vector<16x16xf32>
    %cst_30 = arith.constant dense<0.000000e+00> : vector<16xf32>
    %48 = vector.multi_reduction <add>, %47, %cst_30 [1] : vector<16x16xf32> to vector<16xf32>
    %49 = vector.shape_cast %48 : vector<16xf32> to vector<16x1xf32>
    %c0_31 = arith.constant 0 : index
    %c0_32 = arith.constant 0 : index
    %50 = vector.load %arg11[%c0_31, %c0_32] : memref<1x1xf32, #tpu.memory_space<vmem>>, vector<1x1xf32>
    %51 = vector.broadcast %50 : vector<1x1xf32> to vector<16x1xf32>
    %52 = arith.addf %49, %51 : vector<16x1xf32>
    %c0_33 = arith.constant 0 : index
    %c0_34 = arith.constant 0 : index
    %53 = vector.load %arg12[%c0_33, %c0_34] : memref<16x1xf32, #tpu.memory_space<vmem>>, vector<16x1xf32>
    tpu.vector_store %arg12[%c0_33, %c0_34], %52 {strides = array<i32>} : memref<16x1xf32, #tpu.memory_space<vmem>>, vector<16x1xf32>,
    return
  }
  func.func @transform_0(%arg0: i32) -> (i32, i32) {
    %c0_i32 = arith.constant 0 : i32
    %c0_i32_0 = arith.constant 0 : i32
    return %arg0, %c0_i32 : i32, i32
  }
  func.func @transform_1(%arg0: i32) -> (i32, i32) {
    %c0_i32 = arith.constant 0 : i32
    %c0_i32_0 = arith.constant 0 : i32
    %c0_i32_1 = arith.constant 0 : i32
    return %c0_i32, %c0_i32_0 : i32, i32
  }
  func.func @transform_2(%arg0: i32) -> (i32, i32) {
    %c0_i32 = arith.constant 0 : i32
    %c0_i32_0 = arith.constant 0 : i32
    %c0_i32_1 = arith.constant 0 : i32
    return %c0_i32, %c0_i32_0 : i32, i32
  }
  func.func @transform_3(%arg0: i32) -> (i32, i32) {
    %c0_i32 = arith.constant 0 : i32
    %c0_i32_0 = arith.constant 0 : i32
    %c0_i32_1 = arith.constant 0 : i32
    return %c0_i32, %c0_i32_0 : i32, i32
  }
  func.func @transform_4(%arg0: i32) -> (i32, i32) {
    %c0_i32 = arith.constant 0 : i32
    %c0_i32_0 = arith.constant 0 : i32
    %c0_i32_1 = arith.constant 0 : i32
    return %c0_i32, %c0_i32_0 : i32, i32
  }
  func.func @transform_5(%arg0: i32) -> (i32, i32) {
    %c0_i32 = arith.constant 0 : i32
    %c0_i32_0 = arith.constant 0 : i32
    %c0_i32_1 = arith.constant 0 : i32
    return %c0_i32, %c0_i32_0 : i32, i32
  }
  func.func @transform_6(%arg0: i32) -> (i32, i32) {
    %c0_i32 = arith.constant 0 : i32
    %c0_i32_0 = arith.constant 0 : i32
    %c0_i32_1 = arith.constant 0 : i32
    return %c0_i32, %c0_i32_0 : i32, i32
  }
  func.func @transform_7(%arg0: i32) -> (i32, i32) {
    %c0_i32 = arith.constant 0 : i32
    %c0_i32_0 = arith.constant 0 : i32
    %c0_i32_1 = arith.constant 0 : i32
    return %c0_i32, %c0_i32_0 : i32, i32
  }
  func.func @transform_8(%arg0: i32) -> (i32, i32) {
    %c0_i32 = arith.constant 0 : i32
    %c0_i32_0 = arith.constant 0 : i32
    %c0_i32_1 = arith.constant 0 : i32
    return %c0_i32, %c0_i32_0 : i32, i32
  }
  func.func @transform_9(%arg0: i32) -> (i32, i32) {
    %c0_i32 = arith.constant 0 : i32
    %c0_i32_0 = arith.constant 0 : i32
    %c0_i32_1 = arith.constant 0 : i32
    return %c0_i32, %c0_i32_0 : i32, i32
  }
  func.func @transform_10(%arg0: i32) -> (i32, i32) {
    %c0_i32 = arith.constant 0 : i32
    %c0_i32_0 = arith.constant 0 : i32
    %c0_i32_1 = arith.constant 0 : i32
    return %c0_i32, %c0_i32_0 : i32, i32
  }
  func.func @transform_11(%arg0: i32) -> (i32, i32) {
    %c0_i32 = arith.constant 0 : i32
    %c0_i32_0 = arith.constant 0 : i32
    return %arg0, %c0_i32 : i32, i32
  }
}

</mosaic_0001>

<llo_original>
// kernel: critic_forward.1
$region0: #{critic_forward.1}
  #allocation0 [shape = 'u32[]', space=smem, size = 0x4, offset = 0x4, fixed_abs, tag = 'smem constant byte address 0x4 - core index']
  #allocation1 [shape = 'u32[144,128]{1,0:T(1,128)}', space=vmem, size = 0x12000, scoped, tag = 'internal scratch']
  #allocation2 [shape = 'f32[1,1]{1,0:T(1,128)S(1)}', space=vmem, size = 0x200, scoped, tag = 'scoped memory for critic_forward.1']
  %s0 = inlined_call_operand.vmem [shape: f32[32,32], index: 0, kind: input, shape index: {}]
  %s1 = inlined_call_operand.vmem [shape: f32[32,128], index: 1, kind: input, shape index: {}]
  %s2 = inlined_call_operand.vmem [shape: f32[1,128], index: 2, kind: input, shape index: {}]
  %s3 = inlined_call_operand.vmem [shape: f32[128,64], index: 3, kind: input, shape index: {}]
  %s4 = inlined_call_operand.vmem [shape: f32[1,64], index: 4, kind: input, shape index: {}]
  %s5 = inlined_call_operand.vmem [shape: f32[64,32], index: 5, kind: input, shape index: {}]
  %s6 = inlined_call_operand.vmem [shape: f32[1,32], index: 6, kind: input, shape index: {}]
  %s7 = inlined_call_operand.vmem [shape: f32[32,16], index: 7, kind: input, shape index: {}]
  %s8 = inlined_call_operand.vmem [shape: f32[1,16], index: 8, kind: input, shape index: {}]
  %s9 = inlined_call_operand.vmem [shape: f32[1,16], index: 9, kind: input, shape index: {}]
  %s10 = inlined_call_operand.<no memory space> [shape: f32[1,1], index: 10, kind: input, shape index: {}]
  %s11 = inlined_call_operand.vmem [shape: f32[32,1], index: 11, kind: output, shape index: {}]
  %s12 = sld [smem:[#allocation0]]
  $region77: #{critic_forward.1} parent=0
    _
  %s14 = ssub.s32 1, %s12
  %s15 = scalar_select 0, %s14, %s12
  %v16 = vstv %s10
  %17 = vst [vmem:[#allocation2] sm:$0x1] %v16
  loop: start=0, step=1, limit=4
  $region2: #{critic_forward.1} parent=0 // loop_pre_header
    _
  $region3: #{critic_forward.1} parent=0 // loop_header
    %s19 = sphi 0, %s23
    %p20 = scmp.ge.s32.totalorder %s19, 4
    %s29 = sphi 0, %s31
    %s32 = sphi 0, %s29
    %s33 = sphi 0, %s32
    %s49 = sphi 0, %s33
    %s53 = sphi 0, %s53
    %s55 = sphi 0, %s53
    %s56 = sphi 0, %s55
    %s70 = sphi 0, %s56
    %s74 = sphi 0, %s74
    %s76 = sphi 0, %s74
    %s77 = sphi 0, %s76
    %s91 = sphi 0, %s77
    %s95 = sphi 0, %s95
    %s97 = sphi 0, %s95
    %s98 = sphi 0, %s97
    %s112 = sphi 0, %s98
    %s116 = sphi 0, %s116
    %s118 = sphi 0, %s116
    %s119 = sphi 0, %s118
    %s133 = sphi 0, %s119
    %s137 = sphi 0, %s137
    %s139 = sphi 0, %s137
    %s140 = sphi 0, %s139
    %s154 = sphi 0, %s140
    %s158 = sphi 0, %s158
    %s160 = sphi 0, %s158
    %s161 = sphi 0, %s160
    %s175 = sphi 0, %s161
    %s179 = sphi 0, %s179
    %s181 = sphi 0, %s179
    %s182 = sphi 0, %s181
    %s196 = sphi 0, %s182
    %s200 = sphi 0, %s200
    %s202 = sphi 0, %s200
    %s203 = sphi 0, %s202
    %s217 = sphi 0, %s203
    %s221 = sphi 0, %s221
    %s223 = sphi 0, %s221
    %s224 = sphi 0, %s223
    %s238 = sphi 0, %s224
    %s242 = sphi 0, %s242
    %s244 = sphi 0, %s242
    %s245 = sphi 0, %s244
    %s259 = sphi 0, %s245
    %s265 = sphi 0, %s267
    %s268 = sphi 0, %s265
    %s269 = sphi 0, %s268
    %s285 = sphi 0, %s269
  $region4: #{critic_forward.1} parent=0 // loop_header_branch
    %22 = sbr.rel (%p20) target = $region8
  $region5: #{critic_forward.1} parent=0 // loop_body
    %s24 = ssub.s32 %s19, 1
    %s25 = ssub.s32 %s19, 2
    %s26 = sadd.s32 %s19, 1
    %s27 = ssub.s32 %s19, %s26
    %p28 = scmp.eq.s32.totalorder %s27, 0
    %s30 = sadd.s32 %s29, 1
    %s31 = scalar_select %p28, %s29, %s30
    %p34 = pneg %p28
    %p35 = scmp.eq.s32.totalorder %s19, 1
    %p36 = por %p34, %p35
    %p37 = scmp.ne.s32.totalorder %s29, %s32
    %p38 = scmp.eq.s32.totalorder %s19, 0
    %p39 = por %p37, %p38
    %p40 = scmp.ne.s32.totalorder %s29, %s32
    %p41 = scmp.eq.s32.totalorder %s24, 1
    %p42 = por %p40, %p41
    %p43 = scmp.ne.s32.totalorder %s32, %s33
    %p44 = scmp.eq.s32.totalorder %s24, 0
    %p45 = por %p43, %p44
    %p46 = scmp.ne.s32.totalorder %s32, %s33
    %p47 = scmp.eq.s32.totalorder %s25, 1
    %p48 = por %p46, %p47
    %p50 = scmp.ne.s32.totalorder %s33, %s49
    %p51 = scmp.eq.s32.totalorder %s25, 0
    %p52 = por %p50, %p51
    %s54 = sadd.s32 %s53, 1
    %p57 = scmp.eq.s32.totalorder %s19, 1
    %p58 = scmp.ne.s32.totalorder %s53, %s55
    %p59 = scmp.eq.s32.totalorder %s19, 0
    %p60 = por %p58, %p59
    %p61 = scmp.ne.s32.totalorder %s53, %s55
    %p62 = scmp.eq.s32.totalorder %s24, 1
    %p63 = por %p61, %p62
    %p64 = scmp.ne.s32.totalorder %s55, %s56
    %p65 = scmp.eq.s32.totalorder %s24, 0
    %p66 = por %p64, %p65
    %p67 = scmp.ne.s32.totalorder %s55, %s56
    %p68 = scmp.eq.s32.totalorder %s25, 1
    %p69 = por %p67, %p68
    %p71 = scmp.ne.s32.totalorder %s56, %s70
    %p72 = scmp.eq.s32.totalorder %s25, 0
    %p73 = por %p71, %p72
    %s75 = sadd.s32 %s74, 1
    %p78 = scmp.eq.s32.totalorder %s19, 1
    %p79 = scmp.ne.s32.totalorder %s74, %s76
    %p80 = scmp.eq.s32.totalorder %s19, 0
    %p81 = por %p79, %p80
    %p82 = scmp.ne.s32.totalorder %s74, %s76
    %p83 = scmp.eq.s32.totalorder %s24, 1
    %p84 = por %p82, %p83
    %p85 = scmp.ne.s32.totalorder %s76, %s77
    %p86 = scmp.eq.s32.totalorder %s24, 0
    %p87 = por %p85, %p86
    %p88 = scmp.ne.s32.totalorder %s76, %s77
    %p89 = scmp.eq.s32.totalorder %s25, 1
    %p90 = por %p88, %p89
    %p92 = scmp.ne.s32.totalorder %s77, %s91
    %p93 = scmp.eq.s32.totalorder %s25, 0
    %p94 = por %p92, %p93
    %s96 = sadd.s32 %s95, 1
    %p99 = scmp.eq.s32.totalorder %s19, 1
    %p100 = scmp.ne.s32.totalorder %s95, %s97
    %p101 = scmp.eq.s32.totalorder %s19, 0
    %p102 = por %p100, %p101
    %p103 = scmp.ne.s32.totalorder %s95, %s97
    %p104 = scmp.eq.s32.totalorder %s24, 1
    %p105 = por %p103, %p104
    %p106 = scmp.ne.s32.totalorder %s97, %s98
    %p107 = scmp.eq.s32.totalorder %s24, 0
    %p108 = por %p106, %p107
    %p109 = scmp.ne.s32.totalorder %s97, %s98
    %p110 = scmp.eq.s32.totalorder %s25, 1
    %p111 = por %p109, %p110
    %p113 = scmp.ne.s32.totalorder %s98, %s112
    %p114 = scmp.eq.s32.totalorder %s25, 0
    %p115 = por %p113, %p114
    %s117 = sadd.s32 %s116, 1
    %p120 = scmp.eq.s32.totalorder %s19, 1
    %p121 = scmp.ne.s32.totalorder %s116, %s118
    %p122 = scmp.eq.s32.totalorder %s19, 0
    %p123 = por %p121, %p122
    %p124 = scmp.ne.s32.totalorder %s116, %s118
    %p125 = scmp.eq.s32.totalorder %s24, 1
    %p126 = por %p124, %p125
    %p127 = scmp.ne.s32.totalorder %s118, %s119
    %p128 = scmp.eq.s32.totalorder %s24, 0
    %p129 = por %p127, %p128
    %p130 = scmp.ne.s32.totalorder %s118, %s119
    %p131 = scmp.eq.s32.totalorder %s25, 1
    %p132 = por %p130, %p131
    %p134 = scmp.ne.s32.totalorder %s119, %s133
    %p135 = scmp.eq.s32.totalorder %s25, 0
    %p136 = por %p134, %p135
    %s138 = sadd.s32 %s137, 1
    %p141 = scmp.eq.s32.totalorder %s19, 1
    %p142 = scmp.ne.s32.totalorder %s137, %s139
    %p143 = scmp.eq.s32.totalorder %s19, 0
    %p144 = por %p142, %p143
    %p145 = scmp.ne.s32.totalorder %s137, %s139
    %p146 = scmp.eq.s32.totalorder %s24, 1
    %p147 = por %p145, %p146
    %p148 = scmp.ne.s32.totalorder %s139, %s140
    %p149 = scmp.eq.s32.totalorder %s24, 0
    %p150 = por %p148, %p149
    %p151 = scmp.ne.s32.totalorder %s139, %s140
    %p152 = scmp.eq.s32.totalorder %s25, 1
    %p153 = por %p151, %p152
    %p155 = scmp.ne.s32.totalorder %s140, %s154
    %p156 = scmp.eq.s32.totalorder %s25, 0
    %p157 = por %p155, %p156
    %s159 = sadd.s32 %s158, 1
    %p162 = scmp.eq.s32.totalorder %s19, 1
    %p163 = scmp.ne.s32.totalorder %s158, %s160
    %p164 = scmp.eq.s32.totalorder %s19, 0
    %p165 = por %p163, %p164
    %p166 = scmp.ne.s32.totalorder %s158, %s160
    %p167 = scmp.eq.s32.totalorder %s24, 1
    %p168 = por %p166, %p167
    %p169 = scmp.ne.s32.totalorder %s160, %s161
    %p170 = scmp.eq.s32.totalorder %s24, 0
    %p171 = por %p169, %p170
    %p172 = scmp.ne.s32.totalorder %s160, %s161
    %p173 = scmp.eq.s32.totalorder %s25, 1
    %p174 = por %p172, %p173
    %p176 = scmp.ne.s32.totalorder %s161, %s175
    %p177 = scmp.eq.s32.totalorder %s25, 0
    %p178 = por %p176, %p177
    %s180 = sadd.s32 %s179, 1
    %p183 = scmp.eq.s32.totalorder %s19, 1
    %p184 = scmp.ne.s32.totalorder %s179, %s181
    %p185 = scmp.eq.s32.totalorder %s19, 0
    %p186 = por %p184, %p185
    %p187 = scmp.ne.s32.totalorder %s179, %s181
    %p188 = scmp.eq.s32.totalorder %s24, 1
    %p189 = por %p187, %p188
    %p190 = scmp.ne.s32.totalorder %s181, %s182
    %p191 = scmp.eq.s32.totalorder %s24, 0
    %p192 = por %p190, %p191
    %p193 = scmp.ne.s32.totalorder %s181, %s182
    %p194 = scmp.eq.s32.totalorder %s25, 1
    %p195 = por %p193, %p194
    %p197 = scmp.ne.s32.totalorder %s182, %s196
    %p198 = scmp.eq.s32.totalorder %s25, 0
    %p199 = por %p197, %p198
    %s201 = sadd.s32 %s200, 1
    %p204 = scmp.eq.s32.totalorder %s19, 1
    %p205 = scmp.ne.s32.totalorder %s200, %s202
    %p206 = scmp.eq.s32.totalorder %s19, 0
    %p207 = por %p205, %p206
    %p208 = scmp.ne.s32.totalorder %s200, %s202
    %p209 = scmp.eq.s32.totalorder %s24, 1
    %p210 = por %p208, %p209
    %p211 = scmp.ne.s32.totalorder %s202, %s203
    %p212 = scmp.eq.s32.totalorder %s24, 0
    %p213 = por %p211, %p212
    %p214 = scmp.ne.s32.totalorder %s202, %s203
    %p215 = scmp.eq.s32.totalorder %s25, 1
    %p216 = por %p214, %p215
    %p218 = scmp.ne.s32.totalorder %s203, %s217
    %p219 = scmp.eq.s32.totalorder %s25, 0
    %p220 = por %p218, %p219
    %s222 = sadd.s32 %s221, 1
    %p225 = scmp.eq.s32.totalorder %s19, 1
    %p226 = scmp.ne.s32.totalorder %s221, %s223
    %p227 = scmp.eq.s32.totalorder %s19, 0
    %p228 = por %p226, %p227
    %p229 = scmp.ne.s32.totalorder %s221, %s223
    %p230 = scmp.eq.s32.totalorder %s24, 1
    %p231 = por %p229, %p230
    %p232 = scmp.ne.s32.totalorder %s223, %s224
    %p233 = scmp.eq.s32.totalorder %s24, 0
    %p234 = por %p232, %p233
    %p235 = scmp.ne.s32.totalorder %s223, %s224
    %p236 = scmp.eq.s32.totalorder %s25, 1
    %p237 = por %p235, %p236
    %p239 = scmp.ne.s32.totalorder %s224, %s238
    %p240 = scmp.eq.s32.totalorder %s25, 0
    %p241 = por %p239, %p240
    %s243 = sadd.s32 %s242, 1
    %p246 = scmp.eq.s32.totalorder %s19, 1
    %p247 = scmp.ne.s32.totalorder %s242, %s244
    %p248 = scmp.eq.s32.totalorder %s19, 0
    %p249 = por %p247, %p248
    %p250 = scmp.ne.s32.totalorder %s242, %s244
    %p251 = scmp.eq.s32.totalorder %s24, 1
    %p252 = por %p250, %p251
    %p253 = scmp.ne.s32.totalorder %s244, %s245
    %p254 = scmp.eq.s32.totalorder %s24, 0
    %p255 = por %p253, %p254
    %p256 = scmp.ne.s32.totalorder %s244, %s245
    %p257 = scmp.eq.s32.totalorder %s25, 1
    %p258 = por %p256, %p257
    %p260 = scmp.ne.s32.totalorder %s245, %s259
    %p261 = scmp.eq.s32.totalorder %s25, 0
    %p262 = por %p260, %p261
    %s263 = ssub.s32 %s19, %s26
    %p264 = scmp.eq.s32.totalorder %s263, 0
    %s266 = sadd.s32 %s265, 1
    %s267 = scalar_select %p264, %s265, %s266
    %p270 = pneg %p264
    %p271 = scmp.eq.s32.totalorder %s19, 1
    %p272 = por %p270, %p271
    %p273 = scmp.ne.s32.totalorder %s265, %s268
    %p274 = scmp.eq.s32.totalorder %s19, 0
    %p275 = por %p273, %p274
    %p276 = scmp.ne.s32.totalorder %s265, %s268
    %p277 = scmp.eq.s32.totalorder %s24, 1
    %p278 = por %p276, %p277
    %p279 = scmp.ne.s32.totalorder %s268, %s269
    %p280 = scmp.eq.s32.totalorder %s24, 0
    %p281 = por %p279, %p280
    %p282 = scmp.ne.s32.totalorder %s268, %s269
    %p283 = scmp.eq.s32.totalorder %s25, 1
    %p284 = por %p282, %p283
    %p286 = scmp.ne.s32.totalorder %s269, %s285
    %p287 = scmp.eq.s32.totalorder %s25, 0
    %p288 = por %p286, %p287
    %p289 = scmp.le.s32.totalorder 1, %s19
    %p290 = scmp.lt.s32.totalorder %s19, 3
    %p291 = pnand %p289, %p290
    %p292 = pneg %p291
    // Predicated region
    $region9: #{critic_forward.1} parent=5 // pred_check
      _
    $region10: #{critic_forward.1} parent=5 // pred_check_branch
      %294 = sbr.rel (%p291) target = $region12
    $region11: #{critic_forward.1} parent=5 // pred_region
      %s295 = ssub.s32 %s19, 1
      // Predicated region
      $region13: #{critic_forward.1} parent=11 // pred_check
        %p296 = pneg %p66
      $region14: #{critic_forward.1} parent=11 // pred_check_branch
        %298 = sbr.rel (%p296) target = $region16
      $region15: #{critic_forward.1} parent=11 // pred_region
        _
      $region16: #{critic_forward.1} parent=11 // pred_fallthru
        _
      // Predicated region
      $region17: #{critic_forward.1} parent=11 // pred_check
        %p299 = pneg %p87
      $region18: #{critic_forward.1} parent=11 // pred_check_branch
        %301 = sbr.rel (%p299) target = $region20
      $region19: #{critic_forward.1} parent=11 // pred_region
        _
      $region20: #{critic_forward.1} parent=11 // pred_fallthru
        _
      // Predicated region
      $region21: #{critic_forward.1} parent=11 // pred_check
        %p302 = pneg %p108
      $region22: #{critic_forward.1} parent=11 // pred_check_branch
        %304 = sbr.rel (%p302) target = $region24
      $region23: #{critic_forward.1} parent=11 // pred_region
        _
      $region24: #{critic_forward.1} parent=11 // pred_fallthru
        _
      // Predicated region
      $region25: #{critic_forward.1} parent=11 // pred_check
        %p305 = pneg %p129
      $region26: #{critic_forward.1} parent=11 // pred_check_branch
        %307 = sbr.rel (%p305) target = $region28
      $region27: #{critic_forward.1} parent=11 // pred_region
        _
      $region28: #{critic_forward.1} parent=11 // pred_fallthru
        _
      // Predicated region
      $region29: #{critic_forward.1} parent=11 // pred_check
        %p308 = pneg %p150
      $region30: #{critic_forward.1} parent=11 // pred_check_branch
        %310 = sbr.rel (%p308) target = $region32
      $region31: #{critic_forward.1} parent=11 // pred_region
        _
      $region32: #{critic_forward.1} parent=11 // pred_fallthru
        _
      // Predicated region
      $region33: #{critic_forward.1} parent=11 // pred_check
        %p311 = pneg %p171
      $region34: #{critic_forward.1} parent=11 // pred_check_branch
        %313 = sbr.rel (%p311) target = $region36
      $region35: #{critic_forward.1} parent=11 // pred_region
        _
      $region36: #{critic_forward.1} parent=11 // pred_fallthru
        _
      // Predicated region
      $region37: #{critic_forward.1} parent=11 // pred_check
        %p314 = pneg %p192
      $region38: #{critic_forward.1} parent=11 // pred_check_branch
        %316 = sbr.rel (%p314) target = $region40
      $region39: #{critic_forward.1} parent=11 // pred_region
        _
      $region40: #{critic_forward.1} parent=11 // pred_fallthru
        _
      // Predicated region
      $region41: #{critic_forward.1} parent=11 // pred_check
        %p317 = pneg %p213
      $region42: #{critic_forward.1} parent=11 // pred_check_branch
        %319 = sbr.rel (%p317) target = $region44
      $region43: #{critic_forward.1} parent=11 // pred_region
        _
      $region44: #{critic_forward.1} parent=11 // pred_fallthru
        _
      // Predicated region
      $region45: #{critic_forward.1} parent=11 // pred_check
        %p320 = pneg %p234
      $region46: #{critic_forward.1} parent=11 // pred_check_branch
        %322 = sbr.rel (%p320) target = $region48
      $region47: #{critic_forward.1} parent=11 // pred_region
        _
      $region48: #{critic_forward.1} parent=11 // pred_fallthru
        _
      // Predicated region
      $region49: #{critic_forward.1} parent=11 // pred_check
        %p323 = pneg %p255
      $region50: #{critic_forward.1} parent=11 // pred_check_branch
        %325 = sbr.rel (%p323) target = $region52
      $region51: #{critic_forward.1} parent=11 // pred_region
        _
      $region52: #{critic_forward.1} parent=11 // pred_fallthru
        _
    $region12: #{critic_forward.1} parent=5 // pred_fallthru
      _
    %p326 = scmp.lt.s32.totalorder %s19, 2
    // Predicated region
    $region53: #{critic_forward.1} parent=5 // pred_check
      %p327 = pneg %p326
    $region54: #{critic_forward.1} parent=5 // pred_check_branch
      %329 = sbr.rel (%p327) target = $region56
    $region55: #{critic_forward.1} parent=5 // pred_region
      // Predicated region
      $region57: #{critic_forward.1} parent=55 // pred_check
        %p330 = pneg %p39
      $region58: #{critic_forward.1} parent=55 // pred_check_branch
        %332 = sbr.rel (%p330) target = $region60
      $region59: #{critic_forward.1} parent=55 // pred_region
        %s333 = smul.u32 2, %s19
        %p334 = scmp.lt.s32.totalorder %s333, 3
        %s335 = scalar_select %p334, %s333, 3
        %s336 = smul.addr %s335, 8
        %s337 = scalar_lea.vmem %s0, %s336
        %s338 = smul.u32 2, %s19
      $region60: #{critic_forward.1} parent=55 // pred_fallthru
        _
    $region56: #{critic_forward.1} parent=5 // pred_fallthru
      _
    %p339 = scmp.le.s32.totalorder 1, %s19
    %p340 = scmp.lt.s32.totalorder %s19, 3
    %p341 = pnand %p339, %p340
    %p342 = pneg %p341
    // Predicated region
    $region61: #{critic_forward.1} parent=5 // pred_check
      _
    $region62: #{critic_forward.1} parent=5 // pred_check_branch
      %344 = sbr.rel (%p341) target = $region64
    $region63: #{critic_forward.1} parent=5 // pred_region
      %s345 = ssub.s32 %s19, 1
      %s346 = smul.u32 2, %s24
      %p347 = scmp.lt.s32.totalorder %s346, 3
      %s348 = scalar_select %p347, %s346, 3
      %s349 = smul.addr %s348, 8
      %s350 = scalar_lea.vmem %s0, %s349
      %p351 = pneg %p45
      %p352 = pneg %p42
      %p353 = pneg %p66
      %p354 = pneg %p63
      %p355 = pneg %p87
      %p356 = pneg %p84
      %p357 = pneg %p108
      %p358 = pneg %p105
      %p359 = pneg %p129
      %p360 = pneg %p126
      %p361 = pneg %p150
      %p362 = pneg %p147
      %p363 = pneg %p171
      %p364 = pneg %p168
      %p365 = pneg %p192
      %p366 = pneg %p189
      %p367 = pneg %p213
      %p368 = pneg %p210
      %p369 = pneg %p234
      %p370 = pneg %p231
      %p371 = pneg %p255
      %p372 = pneg %p252
      %p373 = pneg %p281
      %p374 = pneg %p278
      %s375 = smul.u32 2, %s24
      %p376 = scmp.lt.s32.totalorder %s375, 3
      %s377 = scalar_select %p376, %s375, 3
      %s378 = smul.addr %s377, 8
      %s379 = scalar_lea.vmem %s11, %s378
      %s380 = smul.u32 2, %s24
      %p381 = scmp.lt.s32.totalorder %s380, 3
      %s382 = scalar_select %p381, %s380, 3
      %s383 = smul.addr %s382, 8
      %s384 = scalar_lea.vmem %s0, %s383
      %s385 = smul.u32 2, %s24
      %s386 = smul.u32 2, %s24
      %p387 = scmp.lt.s32.totalorder %s386, 3
      %s388 = scalar_select %p387, %s386, 3
      %s389 = smul.addr %s388, 8
      %s390 = scalar_lea.vmem %s11, %s389
      %s391 = smul.u32 2, %s24
      %v392 = vld [vmem:[%s384] sm:$0xff]
      %v393 = vld [vmem:[%s384 + $0x8] sm:$0xff]
      %v394 = vld [vmem:[%s1] sm:$0xff]
      %v395 = vld [vmem:[%s1 + $0x8] sm:$0xff]
      %v396 = vld [vmem:[%s1 + $0x10] sm:$0xff]
      %v397 = vld [vmem:[%s1 + $0x18] sm:$0xff]
      %v398 = vld [vmem:[%s2] sm:$0x1]
      %v400 = vlaneseq
      %v401 = vshrl.u32 %v400, 7
      %v402 = vsub.s32 0, %v401
      %v403 = vrot.slane %v398, %v402
      %vm405 = vcmask 261120
      %v407 = vsel %vm405, %v392, 0
      %v410 = vsel %vm405, %v393, 0
      %412 = vmatprep.subr.mxu0 0.0
      %413 = vmatpush1.msra.mxu0 %v394
      %414 = vmatprep.subr.mxu0 0.0
      %415 = vmatpush1.msra.mxu0 %v395
      %416 = vmatprep.subr.mxu0 0.0
      %417 = vmatpush1.msra.mxu0 %v396
      %418 = vmatprep.subr.mxu0 0.0
      %419 = vmatpush1.msra.mxu0 %v397
      %420 = vmatprep.subr.mxu0 0.0
      %421 = vmatpush1.msra.mxu0 0.0
      %422 = vmatprep.subr.mxu0 0.0
      %423 = vmatpush1.msra.mxu0 0.0
      %424 = vmatprep.subr.mxu0 0.0
      %425 = vmatpush1.msra.mxu0 0.0
      %426 = vmatprep.subr.mxu0 0.0
      %427 = vmatpush1.msra.mxu0 0.0
      %428 = vmatprep.subr.mxu0 0.0
      %429 = vmatpush1.msra.mxu0 0.0
      %430 = vmatprep.subr.mxu0 0.0
      %431 = vmatpush1.msra.mxu0 0.0
      %432 = vmatprep.subr.mxu0 0.0
      %433 = vmatpush1.msra.mxu0 0.0
      %434 = vmatprep.subr.mxu0 0.0
      %435 = vmatpush1.msra.mxu0 0.0
      %436 = vmatprep.subr.mxu0 0.0
      %437 = vmatpush1.msra.mxu0 0.0
      %438 = vmatprep.subr.mxu0 0.0
      %439 = vmatpush1.msra.mxu0 0.0
      %440 = vmatprep.subr.mxu0 0.0
      %441 = vmatpush1.msra.mxu0 0.0
      %442 = vmatprep.subr.mxu0 0.0
      %443 = vmatpush1.msra.mxu0 0.0
      %444 = vmatprep.subr.mxu0 0.0
      %445 = vmatpush1.msra.mxu0 0.0
      %446 = vmatprep.subr.mxu0 0.0
      %447 = vmatpush1.msra.mxu0 0.0
      %448 = vmatprep.subr.mxu0 0.0
      %449 = vmatpush1.msra.mxu0 0.0
      %450 = vmatprep.subr.mxu0 0.0
      %451 = vmatpush1.msra.mxu0 0.0
      %452 = vmatprep.subr.mxu0 0.0
      %453 = vmatpush1.msra.mxu0 0.0
      %454 = vmatprep.subr.mxu0 0.0
      %455 = vmatpush1.msra.mxu0 0.0
      %456 = vmatprep.subr.mxu0 0.0
      %457 = vmatpush1.msra.mxu0 0.0
      %458 = vmatprep.subr.mxu0 0.0
      %459 = vmatpush1.msra.mxu0 0.0
      %460 = vmatprep.subr.mxu0 0.0
      %461 = vmatpush1.msra.mxu0 0.0
      %462 = vmatprep.subr.mxu0 0.0
      %463 = vmatpush1.msra.mxu0 0.0
      %464 = vmatprep.subr.mxu0 0.0
      %465 = vmatpush1.msra.mxu0 0.0
      %466 = vmatprep.subr.mxu0 0.0
      %467 = vmatpush1.msra.mxu0 0.0
      %468 = vmatprep.subr.mxu0 0.0
      %469 = vmatpush1.msra.mxu0 0.0
      %470 = vmatprep.subr.mxu0 0.0
      %471 = vmatpush1.msra.mxu0 0.0
      %472 = vmatprep.subr.mxu0 0.0
      %473 = vmatpush1.msra.mxu0 0.0
      %474 = vmatprep.subr.mxu0 0.0
      %475 = vmatpush1.msra.mxu0 0.0
      %476 = vmatprep.mubr.f32.mxu0 0.0
      %477 = vmatmul.mubr.f32.gmra.mrb[0].mxu0 %v407
      %v478 = vpop.f32.mrb[0].mxu0
      %v479 = vadd.f32 %v403, %v478
      %v480 = vpop.f32.mrb[0].mxu0
      %481 = vmatprep.mubr.f32.mxu0 0.0
      %482 = vmatmul.mubr.f32.gmra.mrb[0].mxu0 %v410
      %v483 = vpop.f32.mrb[0].mxu0
      %v484 = vadd.f32 %v403, %v483
      %v485 = vpop.f32.mrb[0].mxu0
      %486 = vdwg.mxu0
      %vm487 = vcmp.gt.f32.partialorder %v479, 0.0
      %vm488 = vcmp.gt.f32.partialorder %v484, 0.0
      %v489 = vmul.f32 %v479, 1.442695
      %v490 = vpow.pop %v489
      %v491 = vmul.f32 %v484, 1.442695
      %v492 = vpow.pop %v491
      %v493 = vsub.f32 %v490, 1.0
      %v494 = vsub.f32 %v492, 1.0
      %v495 = vsel %vm487, %v479, %v493
      %v496 = vsel %vm488, %v484, %v494
      %v497 = vld [vmem:[%s3] sm:$0xff]
      %v498 = vld [vmem:[%s3 + $0x8] sm:$0xff]
      %v499 = vld [vmem:[%s3 + $0x10] sm:$0xff]
      %v500 = vld [vmem:[%s3 + $0x18] sm:$0xff]
      %v501 = vld [vmem:[%s3 + $0x20] sm:$0xff]
      %v502 = vld [vmem:[%s3 + $0x28] sm:$0xff]
      %v503 = vld [vmem:[%s3 + $0x30] sm:$0xff]
      %v504 = vld [vmem:[%s3 + $0x38] sm:$0xff]
      %v505 = vld [vmem:[%s3 + $0x40] sm:$0xff]
      %v506 = vld [vmem:[%s3 + $0x48] sm:$0xff]
      %v507 = vld [vmem:[%s3 + $0x50] sm:$0xff]
      %v508 = vld [vmem:[%s3 + $0x58] sm:$0xff]
      %v509 = vld [vmem:[%s3 + $0x60] sm:$0xff]
      %v510 = vld [vmem:[%s3 + $0x68] sm:$0xff]
      %v511 = vld [vmem:[%s3 + $0x70] sm:$0xff]
      %v512 = vld [vmem:[%s3 + $0x78] sm:$0xff]
      %v513 = vld [vmem:[%s4] sm:$0x1]
      %v515 = vlaneseq
      %v516 = vshrl.u32 %v515, 7
      %v517 = vsub.s32 0, %v516
      %v518 = vrot.slane %v513, %v517
      %520 = vmatprep.subr.mxu0 0.0
      %521 = vmatpush1.msra.mxu0 %v497
      %522 = vmatprep.subr.mxu0 0.0
      %523 = vmatpush1.msra.mxu0 %v498
      %524 = vmatprep.subr.mxu0 0.0
      %525 = vmatpush1.msra.mxu0 %v499
      %526 = vmatprep.subr.mxu0 0.0
      %527 = vmatpush1.msra.mxu0 %v500
      %528 = vmatprep.subr.mxu0 0.0
      %529 = vmatpush1.msra.mxu0 %v501
      %530 = vmatprep.subr.mxu0 0.0
      %531 = vmatpush1.msra.mxu0 %v502
      %532 = vmatprep.subr.mxu0 0.0
      %533 = vmatpush1.msra.mxu0 %v503
      %534 = vmatprep.subr.mxu0 0.0
      %535 = vmatpush1.msra.mxu0 %v504
      %536 = vmatprep.subr.mxu0 0.0
      %537 = vmatpush1.msra.mxu0 %v505
      %538 = vmatprep.subr.mxu0 0.0
      %539 = vmatpush1.msra.mxu0 %v506
      %540 = vmatprep.subr.mxu0 0.0
      %541 = vmatpush1.msra.mxu0 %v507
      %542 = vmatprep.subr.mxu0 0.0
      %543 = vmatpush1.msra.mxu0 %v508
      %544 = vmatprep.subr.mxu0 0.0
      %545 = vmatpush1.msra.mxu0 %v509
      %546 = vmatprep.subr.mxu0 0.0
      %547 = vmatpush1.msra.mxu0 %v510
      %548 = vmatprep.subr.mxu0 0.0
      %549 = vmatpush1.msra.mxu0 %v511
      %550 = vmatprep.subr.mxu0 0.0
      %551 = vmatpush1.msra.mxu0 %v512
      %552 = vmatprep.subr.mxu0 0.0
      %553 = vmatpush1.msra.mxu0 0.0
      %554 = vmatprep.subr.mxu0 0.0
      %555 = vmatpush1.msra.mxu0 0.0
      %556 = vmatprep.subr.mxu0 0.0
      %557 = vmatpush1.msra.mxu0 0.0
      %558 = vmatprep.subr.mxu0 0.0
      %559 = vmatpush1.msra.mxu0 0.0
      %560 = vmatprep.subr.mxu0 0.0
      %561 = vmatpush1.msra.mxu0 0.0
      %562 = vmatprep.subr.mxu0 0.0
      %563 = vmatpush1.msra.mxu0 0.0
      %564 = vmatprep.subr.mxu0 0.0
      %565 = vmatpush1.msra.mxu0 0.0
      %566 = vmatprep.subr.mxu0 0.0
      %567 = vmatpush1.msra.mxu0 0.0
      %568 = vmatprep.subr.mxu0 0.0
      %569 = vmatpush1.msra.mxu0 0.0
      %570 = vmatprep.subr.mxu0 0.0
      %571 = vmatpush1.msra.mxu0 0.0
      %572 = vmatprep.subr.mxu0 0.0
      %573 = vmatpush1.msra.mxu0 0.0
      %574 = vmatprep.subr.mxu0 0.0
      %575 = vmatpush1.msra.mxu0 0.0
      %576 = vmatprep.subr.mxu0 0.0
      %577 = vmatpush1.msra.mxu0 0.0
      %578 = vmatprep.subr.mxu0 0.0
      %579 = vmatpush1.msra.mxu0 0.0
      %580 = vmatprep.subr.mxu0 0.0
      %581 = vmatpush1.msra.mxu0 0.0
      %582 = vmatprep.subr.mxu0 0.0
      %583 = vmatpush1.msra.mxu0 0.0
      %584 = vmatprep.mubr.f32.mxu0 0.0
      %585 = vmatmul.mubr.f32.gmra.mrb[0].mxu0 %v495
      %v586 = vpop.f32.mrb[0].mxu0
      %v587 = vadd.f32 %v518, %v586
      %v588 = vpop.f32.mrb[0].mxu0
      %589 = vmatprep.mubr.f32.mxu0 0.0
      %590 = vmatmul.mubr.f32.gmra.mrb[0].mxu0 %v496
      %v591 = vpop.f32.mrb[0].mxu0
      %v592 = vadd.f32 %v518, %v591
      %v593 = vpop.f32.mrb[0].mxu0
      %594 = vdwg.mxu0
      %vm595 = vcmp.gt.f32.partialorder %v587, 0.0
      %vm596 = vcmp.gt.f32.partialorder %v592, 0.0
      %v597 = vmul.f32 %v587, 1.442695
      %v598 = vpow.pop %v597
      %v599 = vmul.f32 %v592, 1.442695
      %v600 = vpow.pop %v599
      %v601 = vsub.f32 %v598, 1.0
      %v602 = vsub.f32 %v600, 1.0
      %v603 = vsel %vm595, %v587, %v601
      %v604 = vsel %vm596, %v592, %v602
      %v605 = vld [vmem:[%s5] sm:$0xff]
      %v606 = vld [vmem:[%s5 + $0x8] sm:$0xff]
      %v607 = vld [vmem:[%s5 + $0x10] sm:$0xff]
      %v608 = vld [vmem:[%s5 + $0x18] sm:$0xff]
      %v609 = vld [vmem:[%s5 + $0x20] sm:$0xff]
      %v610 = vld [vmem:[%s5 + $0x28] sm:$0xff]
      %v611 = vld [vmem:[%s5 + $0x30] sm:$0xff]
      %v612 = vld [vmem:[%s5 + $0x38] sm:$0xff]
      %v613 = vld [vmem:[%s6] sm:$0x1]
      %v615 = vlaneseq
      %v616 = vshrl.u32 %v615, 7
      %v617 = vsub.s32 0, %v616
      %v618 = vrot.slane %v613, %v617
      %vm620 = vcmask 523264
      %v622 = vsel %vm620, %v603, 0
      %v625 = vsel %vm620, %v604, 0
      %627 = vmatprep.subr.mxu0 0.0
      %628 = vmatpush1.msra.mxu0 %v605
      %629 = vmatprep.subr.mxu0 0.0
      %630 = vmatpush1.msra.mxu0 %v606
      %631 = vmatprep.subr.mxu0 0.0
      %632 = vmatpush1.msra.mxu0 %v607
      %633 = vmatprep.subr.mxu0 0.0
      %634 = vmatpush1.msra.mxu0 %v608
      %635 = vmatprep.subr.mxu0 0.0
      %636 = vmatpush1.msra.mxu0 %v609
      %637 = vmatprep.subr.mxu0 0.0
      %638 = vmatpush1.msra.mxu0 %v610
      %639 = vmatprep.subr.mxu0 0.0
      %640 = vmatpush1.msra.mxu0 %v611
      %641 = vmatprep.subr.mxu0 0.0
      %642 = vmatpush1.msra.mxu0 %v612
      %643 = vmatprep.subr.mxu0 0.0
      %644 = vmatpush1.msra.mxu0 0.0
      %645 = vmatprep.subr.mxu0 0.0
      %646 = vmatpush1.msra.mxu0 0.0
      %647 = vmatprep.subr.mxu0 0.0
      %648 = vmatpush1.msra.mxu0 0.0
      %649 = vmatprep.subr.mxu0 0.0
      %650 = vmatpush1.msra.mxu0 0.0
      %651 = vmatprep.subr.mxu0 0.0
      %652 = vmatpush1.msra.mxu0 0.0
      %653 = vmatprep.subr.mxu0 0.0
      %654 = vmatpush1.msra.mxu0 0.0
      %655 = vmatprep.subr.mxu0 0.0
      %656 = vmatpush1.msra.mxu0 0.0
      %657 = vmatprep.subr.mxu0 0.0
      %658 = vmatpush1.msra.mxu0 0.0
      %659 = vmatprep.subr.mxu0 0.0
      %660 = vmatpush1.msra.mxu0 0.0
      %661 = vmatprep.subr.mxu0 0.0
      %662 = vmatpush1.msra.mxu0 0.0
      %663 = vmatprep.subr.mxu0 0.0
      %664 = vmatpush1.msra.mxu0 0.0
      %665 = vmatprep.subr.mxu0 0.0
      %666 = vmatpush1.msra.mxu0 0.0
      %667 = vmatprep.subr.mxu0 0.0
      %668 = vmatpush1.msra.mxu0 0.0
      %669 = vmatprep.subr.mxu0 0.0
      %670 = vmatpush1.msra.mxu0 0.0
      %671 = vmatprep.subr.mxu0 0.0
      %672 = vmatpush1.msra.mxu0 0.0
      %673 = vmatprep.subr.mxu0 0.0
      %674 = vmatpush1.msra.mxu0 0.0
      %675 = vmatprep.subr.mxu0 0.0
      %676 = vmatpush1.msra.mxu0 0.0
      %677 = vmatprep.subr.mxu0 0.0
      %678 = vmatpush1.msra.mxu0 0.0
      %679 = vmatprep.subr.mxu0 0.0
      %680 = vmatpush1.msra.mxu0 0.0
      %681 = vmatprep.subr.mxu0 0.0
      %682 = vmatpush1.msra.mxu0 0.0
      %683 = vmatprep.subr.mxu0 0.0
      %684 = vmatpush1.msra.mxu0 0.0
      %685 = vmatprep.subr.mxu0 0.0
      %686 = vmatpush1.msra.mxu0 0.0
      %687 = vmatprep.subr.mxu0 0.0
      %688 = vmatpush1.msra.mxu0 0.0
      %689 = vmatprep.subr.mxu0 0.0
      %690 = vmatpush1.msra.mxu0 0.0
      %691 = vmatprep.mubr.f32.mxu0 0.0
      %692 = vmatmul.mubr.f32.gmra.mrb[0].mxu0 %v622
      %v693 = vpop.f32.mrb[0].mxu0
      %v694 = vadd.f32 %v618, %v693
      %v695 = vpop.f32.mrb[0].mxu0
      %696 = vmatprep.mubr.f32.mxu0 0.0
      %697 = vmatmul.mubr.f32.gmra.mrb[0].mxu0 %v625
      %v698 = vpop.f32.mrb[0].mxu0
      %v699 = vadd.f32 %v618, %v698
      %v700 = vpop.f32.mrb[0].mxu0
      %701 = vdwg.mxu0
      %vm702 = vcmp.gt.f32.partialorder %v694, 0.0
      %vm703 = vcmp.gt.f32.partialorder %v699, 0.0
      %v704 = vmul.f32 %v694, 1.442695
      %v705 = vpow.pop %v704
      %v706 = vmul.f32 %v699, 1.442695
      %v707 = vpow.pop %v706
      %v708 = vsub.f32 %v705, 1.0
      %v709 = vsub.f32 %v707, 1.0
      %v710 = vsel %vm702, %v694, %v708
      %v711 = vsel %vm703, %v699, %v709
      %v712 = vld [vmem:[%s7] sm:$0xff]
      %v713 = vld [vmem:[%s7 + $0x8] sm:$0xff]
      %v714 = vld [vmem:[%s7 + $0x10] sm:$0xff]
      %v715 = vld [vmem:[%s7 + $0x18] sm:$0xff]
      %v716 = vld [vmem:[%s8] sm:$0x1]
      %v718 = vlaneseq
      %v719 = vshrl.u32 %v718, 7
      %v720 = vsub.s32 0, %v719
      %v721 = vrot.slane %v716, %v720
      %v724 = vsel %vm405, %v710, 0
      %v727 = vsel %vm405, %v711, 0
      %729 = vmatprep.subr.mxu0 0.0
      %730 = vmatpush1.msra.mxu0 %v712
      %731 = vmatprep.subr.mxu0 0.0
      %732 = vmatpush1.msra.mxu0 %v713
      %733 = vmatprep.subr.mxu0 0.0
      %734 = vmatpush1.msra.mxu0 %v714
      %735 = vmatprep.subr.mxu0 0.0
      %736 = vmatpush1.msra.mxu0 %v715
      %737 = vmatprep.subr.mxu0 0.0
      %738 = vmatpush1.msra.mxu0 0.0
      %739 = vmatprep.subr.mxu0 0.0
      %740 = vmatpush1.msra.mxu0 0.0
      %741 = vmatprep.subr.mxu0 0.0
      %742 = vmatpush1.msra.mxu0 0.0
      %743 = vmatprep.subr.mxu0 0.0
      %744 = vmatpush1.msra.mxu0 0.0
      %745 = vmatprep.subr.mxu0 0.0
      %746 = vmatpush1.msra.mxu0 0.0
      %747 = vmatprep.subr.mxu0 0.0
      %748 = vmatpush1.msra.mxu0 0.0
      %749 = vmatprep.subr.mxu0 0.0
      %750 = vmatpush1.msra.mxu0 0.0
      %751 = vmatprep.subr.mxu0 0.0
      %752 = vmatpush1.msra.mxu0 0.0
      %753 = vmatprep.subr.mxu0 0.0
      %754 = vmatpush1.msra.mxu0 0.0
      %755 = vmatprep.subr.mxu0 0.0
      %756 = vmatpush1.msra.mxu0 0.0
      %757 = vmatprep.subr.mxu0 0.0
      %758 = vmatpush1.msra.mxu0 0.0
      %759 = vmatprep.subr.mxu0 0.0
      %760 = vmatpush1.msra.mxu0 0.0
      %761 = vmatprep.subr.mxu0 0.0
      %762 = vmatpush1.msra.mxu0 0.0
      %763 = vmatprep.subr.mxu0 0.0
      %764 = vmatpush1.msra.mxu0 0.0
      %765 = vmatprep.subr.mxu0 0.0
      %766 = vmatpush1.msra.mxu0 0.0
      %767 = vmatprep.subr.mxu0 0.0
      %768 = vmatpush1.msra.mxu0 0.0
      %769 = vmatprep.subr.mxu0 0.0
      %770 = vmatpush1.msra.mxu0 0.0
      %771 = vmatprep.subr.mxu0 0.0
      %772 = vmatpush1.msra.mxu0 0.0
      %773 = vmatprep.subr.mxu0 0.0
      %774 = vmatpush1.msra.mxu0 0.0
      %775 = vmatprep.subr.mxu0 0.0
      %776 = vmatpush1.msra.mxu0 0.0
      %777 = vmatprep.subr.mxu0 0.0
      %778 = vmatpush1.msra.mxu0 0.0
      %779 = vmatprep.subr.mxu0 0.0
      %780 = vmatpush1.msra.mxu0 0.0
      %781 = vmatprep.subr.mxu0 0.0
      %782 = vmatpush1.msra.mxu0 0.0
      %783 = vmatprep.subr.mxu0 0.0
      %784 = vmatpush1.msra.mxu0 0.0
      %785 = vmatprep.subr.mxu0 0.0
      %786 = vmatpush1.msra.mxu0 0.0
      %787 = vmatprep.subr.mxu0 0.0
      %788 = vmatpush1.msra.mxu0 0.0
      %789 = vmatprep.subr.mxu0 0.0
      %790 = vmatpush1.msra.mxu0 0.0
      %791 = vmatprep.subr.mxu0 0.0
      %792 = vmatpush1.msra.mxu0 0.0
      %793 = vmatprep.mubr.f32.mxu0 0.0
      %794 = vmatmul.mubr.f32.gmra.mrb[0].mxu0 %v724
      %v795 = vpop.f32.mrb[0].mxu0
      %v796 = vadd.f32 %v721, %v795
      %v797 = vpop.f32.mrb[0].mxu0
      %798 = vmatprep.mubr.f32.mxu0 0.0
      %799 = vmatmul.mubr.f32.gmra.mrb[0].mxu0 %v727
      %v800 = vpop.f32.mrb[0].mxu0
      %v801 = vadd.f32 %v721, %v800
      %v802 = vpop.f32.mrb[0].mxu0
      %803 = vdwg.mxu0
      %vm804 = vcmp.gt.f32.partialorder %v796, 0.0
      %vm805 = vcmp.gt.f32.partialorder %v801, 0.0
      %v806 = vmul.f32 %v796, 1.442695
      %v807 = vpow.pop %v806
      %v808 = vmul.f32 %v801, 1.442695
      %v809 = vpow.pop %v808
      %v810 = vsub.f32 %v807, 1.0
      %v811 = vsub.f32 %v809, 1.0
      %v812 = vsel %vm804, %v796, %v810
      %v813 = vsel %vm805, %v801, %v811
      %v814 = vld [vmem:[%s9] sm:$0x1]
      %v816 = vlaneseq
      %v817 = vshrl.u32 %v816, 7
      %v818 = vsub.s32 0, %v817
      %v819 = vrot.slane %v814, %v818
      %v821 = vmul.f32 %v812, %v819
      %v822 = vmul.f32 %v813, %v819
      %vm823 = vcmask 130048
      %v824 = vsel %vm823, %v821, 0.0
      %825 = vadd.xlane.f32.xlu0 %v824
      %v826 = vpop.xlane.xlu0 %825
      %v827 = vsel %vm823, %v822, 0.0
      %828 = vadd.xlane.f32.xlu0 %v827
      %v829 = vpop.xlane.xlu0 %828
      %v830 = vld [vmem:[#allocation2] sm:$0x1]
      %v832 = vlaneseq
      %v833 = vshrl.u32 %v832, 7
      %v834 = vsub.s32 0, %v833
      %v835 = vrot.slane %v830, %v834
      %v837 = vadd.f32 %v826, %v835
      %v838 = vadd.f32 %v829, %v835
      %vm839 = vcmask 7168
      %840 = vst.msk [vmem:[%s390] sm:$0xff] %vm839, %v837
      %841 = vst.msk [vmem:[%s390 + $0x8] sm:$0xff] %vm839, %v838
      %s842 = smul.u32 2, %s24
      %p843 = scmp.lt.s32.totalorder %s842, 3
      %s844 = scalar_select %p843, %s842, 3
      %s845 = smul.addr %s844, 8
      %s846 = scalar_lea.vmem %s11, %s845
      // Predicated region
      $region65: #{critic_forward.1} parent=63 // pred_check
        %p847 = pneg %p278
      $region66: #{critic_forward.1} parent=63 // pred_check_branch
        %849 = sbr.rel (%p847) target = $region68
      $region67: #{critic_forward.1} parent=63 // pred_region
        %s850 = smul.u32 2, %s24
      $region68: #{critic_forward.1} parent=63 // pred_fallthru
        _
    $region64: #{critic_forward.1} parent=5 // pred_fallthru
      _
    %p851 = scmp.le.s32.totalorder 2, %s19
    // Predicated region
    $region69: #{critic_forward.1} parent=5 // pred_check
      %p852 = pneg %p851
    $region70: #{critic_forward.1} parent=5 // pred_check_branch
      %854 = sbr.rel (%p852) target = $region72
    $region71: #{critic_forward.1} parent=5 // pred_region
      %s855 = ssub.s32 %s19, 2
      // Predicated region
      $region73: #{critic_forward.1} parent=71 // pred_check
        %p856 = pneg %p284
      $region74: #{critic_forward.1} parent=71 // pred_check_branch
        %858 = sbr.rel (%p856) target = $region76
      $region75: #{critic_forward.1} parent=71 // pred_region
        %s859 = smul.u32 2, %s25
        %p860 = scmp.lt.s32.totalorder %s859, 3
        %s861 = scalar_select %p860, %s859, 3
        %s862 = smul.addr %s861, 8
        %s863 = scalar_lea.vmem %s11, %s862
      $region76: #{critic_forward.1} parent=71 // pred_fallthru
        _
    $region72: #{critic_forward.1} parent=5 // pred_fallthru
      _
  $region6: #{critic_forward.1} parent=0 // loop_footer
    %s23 = sadd.s32 1, %s19
  $region7: #{critic_forward.1} parent=0 // loop_footer_branch
    %18 = sbr.rel target = $region3
  $region8: #{critic_forward.1} parent=0 // loop_exit
    _

</llo_original>
